<compile_context>
chip_gen: v5e
topology: v5e:2x2
jax: 0.10.0
libtpu: 0.0.40
codegen_flags: <defaults>
</compile_context>

<pallas_src>
import functools

import jax
import jax.numpy as jnp
from jax import lax
from jax.experimental import pallas as pl
from jax.experimental.pallas import tpu as pltpu

LANES = 128
SUBLANES = 8
MAX_TILE_ROWS = 4096                 # 4096x128 f32 = 2 MiB per input per buffer
_VMEM_LIMIT_BYTES = 32 * 1024 * 1024 # safe on v5e/v6e (128 MiB) and v7x (64 MiB)


def _round_up(x, m):
    return ((x + m - 1) // m) * m


def _cdiv(a, b):
    return -(-a // b)


def _num_tensorcores():
    """Best-effort TensorCores-per-chip (2 on v7x-class, else 1). Safe fallback 1."""
    try:
        info = pltpu.get_tpu_info()
        for attr in ("num_cores", "core_count", "tensorcore_count",
                     "num_tensorcores"):
            v = getattr(info, attr, None)
            if isinstance(v, int) and v >= 1:
                return min(v, 2)
    except Exception:
        pass
    try:
        kind = jax.devices()[0].device_kind.lower()
        if "v7" in kind:
            return 2
    except Exception:
        pass
    return 1


def _focal_loss_kernel(pred_ref, true_ref, out_ref, acc_ref, *,
                       gamma, alpha0, alpha1, n_valid, tile_elems,
                       needs_mask, binary_targets):
    c = pl.program_id(0)            # "parallel" split (megacore)
    i = pl.program_id(1)            # "arbitrary" reduction sweep
    n_inner = pl.num_programs(1)

    @pl.when(i == 0)
    def _():
        acc_ref[...] = jnp.zeros_like(acc_ref)

    x = pred_ref[...].astype(jnp.float32)
    y = true_ref[...].astype(jnp.float32)

    # Numerically stable BCE-with-logits (same formulation PyTorch uses).
    e = jnp.exp(-jnp.abs(x))
    bce = jnp.maximum(x, 0.0) - x * y + jnp.log1p(e)

    if binary_targets:
        # exp(-bce) == sigmoid((2y-1)*x) exactly for y in {0,1}; reuses
        # e = exp(-|x|) so we skip a second EUP exp per element (matters on
        # v7x where HBM is fast enough for the exp chain to become binding).
        z = (2.0 * y - 1.0) * x
        p_t = jnp.where(z >= 0.0, 1.0, e) / (1.0 + e)
    else:
        p_t = jnp.exp(-bce)

    q = 1.0 - p_t

    # Specialize small integer gamma to repeated multiplies (avoids the
    # exp(gamma*log(.)) lowering of a general pow -> 2 fewer EUP ops/element).
    g = float(gamma)
    if g == 1.0:
        modulating = q
    elif g == 2.0:
        modulating = q * q
    elif g.is_integer() and 1.0 < g <= 8.0:
        modulating = q
        for _ in range(int(g) - 1):
            modulating = modulating * q
    else:
        modulating = q ** g

    if alpha0 == alpha1:
        loss = modulating * bce if alpha0 == 1.0 else (alpha0 * modulating) * bce
    else:
        alpha_t = alpha1 * y + alpha0 * (1.0 - y)
        loss = alpha_t * modulating * bce

    def _accumulate(vals):
        # (tile_rows,128) -> (tile_rows/8, 8, 128) respects the (8,128) vreg
        # tiling, so this lowers to pure vreg adds into a single accumulator;
        # the cross-lane/sublane reduce is deferred to the wrapper.
        acc_ref[...] += jnp.sum(vals.reshape(-1, SUBLANES, LANES), axis=0)

    if needs_mask:
        # Only tiles that reach past n_valid pay for the iota mask. The index
        # is the UNclamped global tile index, so over-run (index_map-clamped
        # duplicate) tiles and the Pallas-padded partial edge contribute 0.
        global_tile = c * n_inner + i
        remaining = n_valid - global_tile * tile_elems    # scalar, may be <= 0
        has_pad = remaining < tile_elems

        @pl.when(jnp.logical_not(has_pad))
        def _():
            _accumulate(loss)

        @pl.when(has_pad)
        def _():
            rows = lax.broadcasted_iota(jnp.int32, loss.shape, 0)
            cols = lax.broadcasted_iota(jnp.int32, loss.shape, 1)
            in_tile_idx = rows * LANES + cols
            _accumulate(jnp.where(in_tile_idx < remaining, loss, 0.0))
    else:
        _accumulate(loss)

    @pl.when(i == n_inner - 1)
    def _():
        out_ref[0, :, :] = acc_ref[...]


def focal_loss(y_pred, y_true, gamma=2.0, alpha=1.0, reduction="mean",
               binary_targets=True):
    """Pallas TPU implementation of FocalLoss.forward ('mean' / 'sum')."""
    # TODO(synk): reduction='none' (full per-element loss map) not implemented.
    assert reduction in ("mean", "sum"), "only 'mean'/'sum' implemented"
    if isinstance(alpha, (tuple, list)):
        alpha0, alpha1 = float(alpha[0]), float(alpha[1])
    else:
        alpha0 = alpha1 = float(alpha)
    assert y_pred.shape == y_true.shape

    n_valid = int(y_pred.size)
    rows8 = _round_up(_cdiv(n_valid, LANES), SUBLANES)   # lane/sublane-aligned rows
    tile_rows = min(MAX_TILE_ROWS, rows8)
    nblocks_real = _cdiv(rows8, tile_rows)

    # Megacore split across TensorCores only when there is enough work per core.
    num_cores = _num_tensorcores()
    num_splits = num_cores if (num_cores > 1 and
                               nblocks_real >= 4 * num_cores) else 1
    total_tiles = _round_up(nblocks_real, num_splits)
    inner_steps = total_tiles // num_splits
    last_block = nblocks_real - 1
    tile_elems = tile_rows * LANES
    needs_mask = total_tiles * tile_elems != n_valid

    # Pad only up to the lane/sublane boundary (<= 8*128-1 elements), never to
    # the full tile grid; the kernel tail-mask covers everything beyond n_valid.
    pad = rows8 * LANES - n_valid
    flat_pred = jnp.ravel(y_pred)     # native dtype; cast happens in-kernel
    flat_true = jnp.ravel(y_true)
    if pad:
        # TODO(synk): this small pad still costs one HBM copy of the streams;
        # exact 128-multiple inputs (the common segmentation case) avoid it.
        flat_pred = jnp.pad(flat_pred, (0, pad))
        flat_true = jnp.pad(flat_true, (0, pad))
    pred2d = flat_pred.reshape(rows8, LANES)
    true2d = flat_true.reshape(rows8, LANES)

    kernel = functools.partial(
        _focal_loss_kernel,
        gamma=gamma, alpha0=alpha0, alpha1=alpha1,
        n_valid=n_valid, tile_elems=tile_elems,
        needs_mask=needs_mask, binary_targets=binary_targets)

    def in_index_map(c, i):
        # Clamp to the last real block; over-run tiles are revisits of that
        # block and are fully zeroed by the (unclamped-index) tail mask.
        return (jnp.minimum(c * inner_steps + i, last_block), 0)

    in_spec = pl.BlockSpec((tile_rows, LANES), in_index_map)

    partials = pl.pallas_call(
        kernel,
        out_shape=jax.ShapeDtypeStruct((num_splits, SUBLANES, LANES),
                                       jnp.float32),
        grid_spec=pltpu.PrefetchScalarGridSpec(
            num_scalar_prefetch=0,
            grid=(num_splits, inner_steps),
            in_specs=[in_spec, in_spec],
            out_specs=pl.BlockSpec((1, SUBLANES, LANES),
                                   lambda c, i: (c, 0, 0)),
            scratch_shapes=[pltpu.VMEM((SUBLANES, LANES), jnp.float32)],
        ),
        compiler_params=pltpu.CompilerParams(
            dimension_semantics=("parallel", "arbitrary"),
            vmem_limit_bytes=_VMEM_LIMIT_BYTES),
    )(pred2d, true2d)

    total = jnp.sum(partials)
    if reduction == "sum":
        return total
    return total / n_valid


def _focal_loss_ref(y_pred, y_true, gamma=2.0, alpha=1.0):
    if isinstance(alpha, (tuple, list)):
        alpha0, alpha1 = float(alpha[0]), float(alpha[1])
    else:
        alpha0 = alpha1 = float(alpha)
    x = y_pred.astype(jnp.float32)
    y = y_true.astype(jnp.float32)
    bce = jnp.maximum(x, 0.0) - x * y + jnp.log1p(jnp.exp(-jnp.abs(x)))
    p_t = jnp.exp(-bce)
    loss = (alpha1 * y + alpha0 * (1.0 - y)) * (1.0 - p_t) ** gamma * bce
    return jnp.mean(loss)


if __name__ == "__main__":
    # Module hyperparameters from __init__ defaults: gamma=2.0, alpha=1.0.
    gamma, alpha = 2.0, 1.0
    key = jax.random.PRNGKey(0)
    k1, k2, k3, k4, k5, k6 = jax.random.split(key, 6)

    # 1) Primary small NCHW case (exact 128-multiple -> no pad, no mask).
    y_pred = jax.random.normal(k1, (2, 4, 16, 16), dtype=jnp.float32)
    y_true = (jax.random.uniform(k2, (2, 4, 16, 16)) > 0.5).astype(jnp.float32)
    out = jax.block_until_ready(
        focal_loss(y_pred, y_true, gamma=gamma, alpha=alpha, reduction="mean"))
    ref = _focal_loss_ref(y_pred, y_true, gamma=gamma, alpha=alpha)
    assert jnp.allclose(out, ref, rtol=1e-5, atol=1e-6), (out, ref)

    # 2) Small ragged case exercising the tail-mask / tiny-pad path.
    y_pred2 = jax.random.normal(k3, (2, 3, 15, 17), dtype=jnp.float32)
    y_true2 = (jax.random.uniform(k4, (2, 3, 15, 17)) > 0.5).astype(jnp.float32)
    out2 = jax.block_until_ready(
        focal_loss(y_pred2, y_true2, gamma=gamma, alpha=alpha, reduction="mean"))
    ref2 = _focal_loss_ref(y_pred2, y_true2, gamma=gamma, alpha=alpha)
    assert jnp.allclose(out2, ref2, rtol=1e-5, atol=1e-6), (out2, ref2)

    # 3) Multi-tile ragged case: exercises the clamped index_map + partial
    #    edge block + accumulation across grid steps.
    y_pred3 = jax.random.normal(k5, (1, 1, 769, 701), dtype=jnp.float32)
    y_true3 = (jax.random.uniform(k6, (1, 1, 769, 701)) > 0.5).astype(jnp.float32)
    out3 = jax.block_until_ready(
        focal_loss(y_pred3, y_true3, gamma=gamma, alpha=alpha, reduction="mean"))
    ref3 = _focal_loss_ref(y_pred3, y_true3, gamma=gamma, alpha=alpha)
    assert jnp.allclose(out3, ref3, rtol=1e-4, atol=1e-6), (out3, ref3)

    # 4) Narrow-dtype predictions streamed natively (cast happens in-kernel).
    y_pred4 = y_pred.astype(jnp.bfloat16)
    out4 = jax.block_until_ready(
        focal_loss(y_pred4, y_true, gamma=gamma, alpha=alpha, reduction="mean"))
    ref4 = _focal_loss_ref(y_pred4, y_true, gamma=gamma, alpha=alpha)
    assert jnp.allclose(out4, ref4, rtol=1e-5, atol=1e-6), (out4, ref4)

    print("KERNEL_OK")
</pallas_src>

<mosaic_0001>
module attributes {stable_mosaic.version = 11 : i64} {
  func.func @_focal_loss_kernel(%arg0: i32, %arg1: i32, %arg2: memref<16x128xf32, #tpu.memory_space<vmem>>, %arg3: memref<16x128xf32, #tpu.memory_space<vmem>>, %arg4: memref<1x8x128xf32, #tpu.memory_space<vmem>>, %arg5: memref<8x128xf32, #tpu.memory_space<vmem>>) attributes {dimension_semantics = [#tpu.dimension_semantics<parallel>, #tpu.dimension_semantics<arbitrary>], iteration_bounds = array<i64: 1, 1>, scalar_prefetch = 0 : i64, scratch_operands = 1 : i64, tpu.core_type = #tpu.core_type<tc>, window_params = [{transform_indices = @transform_0, window_bounds = array<i64: 16, 128>}, {transform_indices = @transform_1, window_bounds = array<i64: 16, 128>}, {transform_indices = @transform_2, window_bounds = array<i64: 1, 8, 128>}]} {
    %c0_i32 = arith.constant 0 : i32
    %0 = arith.cmpi eq, %arg1, %c0_i32 : i32
    %1 = arith.extui %0 : i1 to i32
    %c0_i32_0 = arith.constant 0 : i32
    %2 = arith.cmpi ne, %1, %c0_i32_0 : i32
    scf.if %2 {
      %cst_18 = arith.constant 0.000000e+00 : f32
      %39 = vector.broadcast %cst_18 : f32 to vector<8x128xf32>
      %c0_19 = arith.constant 0 : index
      %c0_20 = arith.constant 0 : index
      %40 = vector.load %arg5[%c0_19, %c0_20] : memref<8x128xf32, #tpu.memory_space<vmem>>, vector<8x128xf32>
      tpu.vector_store %arg5[%c0_19, %c0_20], %39 {strides = array<i32>} : memref<8x128xf32, #tpu.memory_space<vmem>>, vector<8x128xf32>,
    } else {
    }
    %c0 = arith.constant 0 : index
    %c0_1 = arith.constant 0 : index
    %3 = vector.load %arg2[%c0, %c0_1] : memref<16x128xf32, #tpu.memory_space<vmem>>, vector<16x128xf32>
    %c0_2 = arith.constant 0 : index
    %c0_3 = arith.constant 0 : index
    %4 = vector.load %arg3[%c0_2, %c0_3] : memref<16x128xf32, #tpu.memory_space<vmem>>, vector<16x128xf32>
    %5 = math.absf %3 : vector<16x128xf32>
    %cst = arith.constant 0.000000e+00 : f32
    %6 = vector.broadcast %cst : f32 to vector<16x128xf32>
    %7 = arith.subf %6, %5 : vector<16x128xf32>
    %8 = math.exp %7 : vector<16x128xf32>
    %cst_4 = arith.constant 0.000000e+00 : f32
    %9 = vector.broadcast %cst_4 : f32 to vector<16x128xf32>
    %10 = arith.maximumf %3, %9 : vector<16x128xf32>
    %11 = arith.mulf %3, %4 : vector<16x128xf32>
    %12 = arith.subf %10, %11 : vector<16x128xf32>
    %13 = math.log1p %8 : vector<16x128xf32>
    %14 = arith.addf %12, %13 : vector<16x128xf32>
    %cst_5 = arith.constant 2.000000e+00 : f32
    %15 = vector.broadcast %cst_5 : f32 to vector<16x128xf32>
    %16 = arith.mulf %15, %4 : vector<16x128xf32>
    %cst_6 = arith.constant 1.000000e+00 : f32
    %17 = vector.broadcast %cst_6 : f32 to vector<16x128xf32>
    %18 = arith.subf %16, %17 : vector<16x128xf32>
    %19 = arith.mulf %18, %3 : vector<16x128xf32>
    %cst_7 = arith.constant 0.000000e+00 : f32
    %20 = vector.broadcast %cst_7 : f32 to vector<16x128xf32>
    %21 = arith.cmpf oge, %19, %20 : vector<16x128xf32>
    %cst_8 = arith.constant 1.000000e+00 : f32
    %22 = vector.broadcast %cst_8 : f32 to vector<16x128xf32>
    %23 = arith.select %21, %22, %8 : vector<16x128xi1>, vector<16x128xf32>
    %cst_9 = arith.constant 1.000000e+00 : f32
    %24 = vector.broadcast %cst_9 : f32 to vector<16x128xf32>
    %25 = arith.addf %24, %8 : vector<16x128xf32>
    %26 = arith.divf %23, %25 : vector<16x128xf32>
    %cst_10 = arith.constant 1.000000e+00 : f32
    %27 = vector.broadcast %cst_10 : f32 to vector<16x128xf32>
    %28 = arith.subf %27, %26 : vector<16x128xf32>
    %29 = arith.mulf %28, %28 : vector<16x128xf32>
    %30 = arith.mulf %29, %14 : vector<16x128xf32>
    %c0_11 = arith.constant 0 : index
    %c0_12 = arith.constant 0 : index
    %31 = vector.load %arg5[%c0_11, %c0_12] : memref<8x128xf32, #tpu.memory_space<vmem>>, vector<8x128xf32>
    %32 = vector.shape_cast %30 : vector<16x128xf32> to vector<2x8x128xf32>
    %cst_13 = arith.constant dense<0.000000e+00> : vector<8x128xf32>
    %33 = vector.multi_reduction <add>, %32, %cst_13 [0] : vector<2x8x128xf32> to vector<8x128xf32>
    %34 = arith.addf %31, %33 : vector<8x128xf32>
    %c0_14 = arith.constant 0 : index
    %c0_15 = arith.constant 0 : index
    %35 = vector.load %arg5[%c0_14, %c0_15] : memref<8x128xf32, #tpu.memory_space<vmem>>, vector<8x128xf32>
    tpu.vector_store %arg5[%c0_14, %c0_15], %34 {strides = array<i32>} : memref<8x128xf32, #tpu.memory_space<vmem>>, vector<8x128xf32>,
    %c0_i32_16 = arith.constant 0 : i32
    %36 = arith.cmpi eq, %arg1, %c0_i32_16 : i32
    %37 = arith.extui %36 : i1 to i32
    %c0_i32_17 = arith.constant 0 : i32
    %38 = arith.cmpi ne, %37, %c0_i32_17 : i32
    scf.if %38 {
      %c0_18 = arith.constant 0 : index
      %c0_19 = arith.constant 0 : index
      %39 = vector.load %arg5[%c0_18, %c0_19] : memref<8x128xf32, #tpu.memory_space<vmem>>, vector<8x128xf32>
      %c0_20 = arith.constant 0 : index
      %c0_21 = arith.constant 0 : index
      %c0_22 = arith.constant 0 : index
      %40 = vector.load %arg4[%c0_20, %c0_21, %c0_22] : memref<1x8x128xf32, #tpu.memory_space<vmem>>, vector<1x8x128xf32>
      %41 = vector.shape_cast %40 : vector<1x8x128xf32> to vector<8x128xf32>
      %42 = vector.shape_cast %39 : vector<8x128xf32> to vector<1x8x128xf32>
      tpu.vector_store %arg4[%c0_20, %c0_21, %c0_22], %42 {strides = array<i32>} : memref<1x8x128xf32, #tpu.memory_space<vmem>>, vector<1x8x128xf32>,
    } else {
    }
    return
  }
  func.func @transform_0(%arg0: i32, %arg1: i32) -> (i32, i32) {
    %c1_i32 = arith.constant 1 : i32
    %0 = arith.muli %arg0, %c1_i32 : i32
    %1 = arith.addi %0, %arg1 : i32
    %c0_i32 = arith.constant 0 : i32
    %2 = arith.minsi %1, %c0_i32 : i32
    %c0_i32_0 = arith.constant 0 : i32
    %c0_i32_1 = arith.constant 0 : i32
    return %2, %c0_i32_0 : i32, i32
  }
  func.func @transform_1(%arg0: i32, %arg1: i32) -> (i32, i32) {
    %c1_i32 = arith.constant 1 : i32
    %0 = arith.muli %arg0, %c1_i32 : i32
    %1 = arith.addi %0, %arg1 : i32
    %c0_i32 = arith.constant 0 : i32
    %2 = arith.minsi %1, %c0_i32 : i32
    %c0_i32_0 = arith.constant 0 : i32
    %c0_i32_1 = arith.constant 0 : i32
    return %2, %c0_i32_0 : i32, i32
  }
  func.func @transform_2(%arg0: i32, %arg1: i32) -> (i32, i32, i32) {
    %c0_i32 = arith.constant 0 : i32
    %c0_i32_0 = arith.constant 0 : i32
    %c0_i32_1 = arith.constant 0 : i32
    return %arg0, %c0_i32, %c0_i32_0 : i32, i32, i32
  }
}

</mosaic_0001>

<llo_original>
// kernel: tpu_custom_call.1
$region0: #{tpu_custom_call.1}
  #allocation0 [shape = 'u32[]', space=smem, size = 0x4, offset = 0x4, fixed_abs, tag = 'smem constant byte address 0x4 - core index']
  #allocation1 [shape = 'u32[72,128]{1,0:T(1,128)}', space=vmem, size = 0x9000, scoped, tag = 'internal scratch']
  #allocation2 [shape = 'f32[8,128]{1,0:T(8,128)}', space=vmem, size = 0x1000, scoped, tag = 'scratch operand']
  %s0 = inlined_call_operand.hbm [shape: f32[16,128], index: 0, kind: input, shape index: {}]
  %s1 = inlined_call_operand.hbm [shape: f32[16,128], index: 1, kind: input, shape index: {}]
  %s2 = inlined_call_operand.hbm [shape: f32[1,8,128], index: 2, kind: output, shape index: {}]
  %s3 = sld [smem:[#allocation0]]
  $region34: #{tpu_custom_call.1} parent=0
    _
  %s5 = ssub.s32 1, %s3
  %s6 = scalar_select 0, %s5, %s3
  $region1: #{tpu_custom_call.1} parent=0
    #allocation3 [shape = 'u8[8192]{0}', space=vmem, size = 0x2000, scoped, tag = 'input window, operand 0, single buffered']
    #allocation4 [shape = 's32[1]{0}', space=sflag, size = 0x4, scoped, tag = 'scoped memory for tpu_custom_call.1']
    #allocation5 [shape = 's32[1]{0}', space=sflag, size = 0x4, scoped, tag = 'scoped memory for tpu_custom_call.1']
    #allocation6 [shape = 'u8[8192]{0}', space=vmem, size = 0x2000, scoped, tag = 'input window, operand 1, single buffered']
    #allocation7 [shape = 's32[1]{0}', space=sflag, size = 0x4, scoped, tag = 'scoped memory for tpu_custom_call.1']
    #allocation8 [shape = 'u8[4096]{0}', space=vmem, size = 0x1000, scoped, tag = 'output window, operand 0, single buffered']
    %7 = vsyncpa [#allocation4], 0
    %8 = vsyncpa [#allocation7], 0
    %9 = vsyncpa [#allocation5], 0
    // Predicated region
    $region2: #{tpu_custom_call.1} parent=1 // pred_check
      _
    $region3: #{tpu_custom_call.1} parent=1 // pred_check_branch
      %11 = sbr.rel (0) target = $region5
    $region4: #{tpu_custom_call.1} parent=1 // pred_region
      %s12 = sadd.s32 0, 0
      %p13 = scmp.lt.s32.totalorder %s12, 0
      %s14 = scalar_select %p13, %s12, 0
      %s15 = smul.u32 2, %s14
      %17 = vsyncadd [#allocation4], 0
      %s18 = smul.addr %s15, 8
      %s19 = scalar_lea.hbm %s0, %s18
      %s20 = sshll.u32 %s19, 4
      %s21 = int_to_ptr.hbm [resolvable:$true] %s20
      %s22 = sshll.u32 [#allocation3], 4
      %s23 = int_to_ptr.vmem [resolvable:$true] %s22
      %28 = dma.hbm_to_vmem [thread:$0]  %s21, 256, %s23, [#allocation4], 128, 128, 8
    $region5: #{tpu_custom_call.1} parent=1 // pred_fallthru
      _
    // Predicated region
    $region6: #{tpu_custom_call.1} parent=1 // pred_check
      _
    $region7: #{tpu_custom_call.1} parent=1 // pred_check_branch
      %30 = sbr.rel (0) target = $region9
    $region8: #{tpu_custom_call.1} parent=1 // pred_region
      %s31 = sadd.s32 0, 0
      %p32 = scmp.lt.s32.totalorder %s31, 0
      %s33 = scalar_select %p32, %s31, 0
      %s34 = smul.u32 2, %s33
      %36 = vsyncadd [#allocation7], 0
      %s37 = smul.addr %s34, 8
      %s38 = scalar_lea.hbm %s1, %s37
      %s39 = sshll.u32 %s38, 4
      %s40 = int_to_ptr.hbm [resolvable:$true] %s39
      %s41 = sshll.u32 [#allocation6], 4
      %s42 = int_to_ptr.vmem [resolvable:$true] %s41
      %47 = dma.hbm_to_vmem [thread:$0]  %s40, 256, %s42, [#allocation7], 128, 128, 8
    $region9: #{tpu_custom_call.1} parent=1 // pred_fallthru
      _
    // Predicated region
    $region10: #{tpu_custom_call.1} parent=1 // pred_check
      _
    $region11: #{tpu_custom_call.1} parent=1 // pred_check_branch
      %49 = sbr.rel (0) target = $region13
    $region12: #{tpu_custom_call.1} parent=1 // pred_region
      %51 = dma.done [#allocation4], 256
    $region13: #{tpu_custom_call.1} parent=1 // pred_fallthru
      _
    // Predicated region
    $region14: #{tpu_custom_call.1} parent=1 // pred_check
      _
    $region15: #{tpu_custom_call.1} parent=1 // pred_check_branch
      %53 = sbr.rel (0) target = $region17
    $region16: #{tpu_custom_call.1} parent=1 // pred_region
      %55 = dma.done [#allocation7], 256
    $region17: #{tpu_custom_call.1} parent=1 // pred_fallthru
      _
    %s56 = sadd.s32 0, 0
    %p57 = scmp.lt.s32.totalorder %s56, 0
    %s58 = scalar_select %p57, %s56, 0
    %s59 = smul.u32 2, %s58
    %s60 = sadd.s32 0, 0
    %p61 = scmp.lt.s32.totalorder %s60, 0
    %s62 = scalar_select %p61, %s60, 0
    %s63 = smul.u32 2, %s62
    %p64 = scmp.eq.s32.totalorder 0, 0
    // Predicated region
    $region18: #{tpu_custom_call.1} parent=1 // pred_check
      %p65 = pneg %p64
    $region19: #{tpu_custom_call.1} parent=1 // pred_check_branch
      %67 = sbr.rel (%p65) target = $region21
    $region20: #{tpu_custom_call.1} parent=1 // pred_region
      %68 = vst [vmem:[#allocation2] sm:$0xff] 0.0
    $region21: #{tpu_custom_call.1} parent=1 // pred_fallthru
      _
    %v69 = vld [vmem:[#allocation3] sm:$0xff]
    %v70 = vld [vmem:[#allocation3 + $0x8] sm:$0xff]
    %v71 = vld [vmem:[#allocation6] sm:$0xff]
    %v72 = vld [vmem:[#allocation6 + $0x8] sm:$0xff]
    %v73 = vand.u32 2147483647, %v69
    %v74 = vand.u32 2147483647, %v70
    %v75 = vsub.f32 0.0, %v73
    %v76 = vsub.f32 0.0, %v74
    %v77 = vmul.f32 %v75, 1.442695
    %v78 = vpow.pop %v77
    %v79 = vmul.f32 %v76, 1.442695
    %v80 = vpow.pop %v79
    %v81 = vmax.f32 %v69, 0.0
    %v82 = vmax.f32 %v70, 0.0
    %v83 = vmul.f32 %v69, %v71
    %v84 = vmul.f32 %v70, %v72
    %v85 = vsub.f32 %v81, %v83
    %v86 = vsub.f32 %v82, %v84
    %v87 = vadd.f32 %v78, 1.0
    %v88 = vlog2.pop %v87
    %v89 = vmul.f32 %v88, 0.6931472
    %v90 = vmul.f32 -0.5, %v78
    %v91 = vadd.f32 %v90, 1.0
    %v92 = vmul.f32 %v91, %v78
    %v93 = vand.u32 2147483647, %v78
    %vm94 = vcmp.lt.f32.partialorder %v93, 0.0004427343
    %v95 = vsel %vm94, %v92, %v89
    %v96 = vadd.f32 %v80, 1.0
    %v97 = vlog2.pop %v96
    %v98 = vmul.f32 %v97, 0.6931472
    %v99 = vmul.f32 -0.5, %v80
    %v100 = vadd.f32 %v99, 1.0
    %v101 = vmul.f32 %v100, %v80
    %v102 = vand.u32 2147483647, %v80
    %vm103 = vcmp.lt.f32.partialorder %v102, 0.0004427343
    %v104 = vsel %vm103, %v101, %v98
    %v105 = vadd.f32 %v85, %v95
    %v106 = vadd.f32 %v86, %v104
    %v107 = vmul.f32 %v71, 2.0
    %v108 = vmul.f32 %v72, 2.0
    %v109 = vsub.f32 %v107, 1.0
    %v110 = vsub.f32 %v108, 1.0
    %v111 = vmul.f32 %v109, %v69
    %v112 = vmul.f32 %v110, %v70
    %vm113 = vcmp.ge.f32.partialorder %v111, 0.0
    %vm114 = vcmp.ge.f32.partialorder %v112, 0.0
    %v115 = vsel %vm113, 1.0, %v78
    %v116 = vsel %vm114, 1.0, %v80
    %v117 = vadd.f32 %v78, 1.0
    %v118 = vadd.f32 %v80, 1.0
    %v119 = vrcp.pop %v117
    %v120 = vmul.f32 %v117, %v119
    %v121 = vsub.f32 1.0, %v120
    %v122 = vmul.f32 %v119, %v121
    %v123 = vadd.f32 %v119, %v122
    %vm124 = vweird.f32 %v117
    %vm125 = vweird.f32 %v119
    %vm126 = vmor %vm124, %vm125
    %v127 = vsel %vm126, %v119, %v123
    %v128 = vand.u32 2147483647, %v117
    %vm129 = vcmp.eq.f32.partialorder %v128, 8.507059e+37
    %v130 = vand.u32 %v117, 2147483648
    %v131 = vor.u32 1.1754944e-38, %v130
    %v132 = vsel %vm129, %v131, %v127
    %v133 = vmul.f32 %v115, %v132
    %v134 = vrcp.pop %v118
    %v135 = vmul.f32 %v118, %v134
    %v136 = vsub.f32 1.0, %v135
    %v137 = vmul.f32 %v134, %v136
    %v138 = vadd.f32 %v134, %v137
    %vm139 = vweird.f32 %v118
    %vm140 = vweird.f32 %v134
    %vm141 = vmor %vm139, %vm140
    %v142 = vsel %vm141, %v134, %v138
    %v143 = vand.u32 2147483647, %v118
    %vm144 = vcmp.eq.f32.partialorder %v143, 8.507059e+37
    %v145 = vand.u32 %v118, 2147483648
    %v146 = vor.u32 1.1754944e-38, %v145
    %v147 = vsel %vm144, %v146, %v142
    %v148 = vmul.f32 %v116, %v147
    %v149 = vsub.f32 1.0, %v133
    %v150 = vsub.f32 1.0, %v148
    %v151 = vmul.f32 %v149, %v149
    %v152 = vmul.f32 %v150, %v150
    %v153 = vmul.f32 %v151, %v105
    %v154 = vmul.f32 %v152, %v106
    %v155 = vld [vmem:[#allocation2] sm:$0xff]
    %v156 = vadd.f32 %v153, %v154
    %v157 = vadd.f32 %v155, %v156
    %158 = vst [vmem:[#allocation2] sm:$0xff] %v157
    // Predicated region
    $region22: #{tpu_custom_call.1} parent=1 // pred_check
      %p159 = pneg %p64
    $region23: #{tpu_custom_call.1} parent=1 // pred_check_branch
      %161 = sbr.rel (%p159) target = $region25
    $region24: #{tpu_custom_call.1} parent=1 // pred_region
      %v162 = vld [vmem:[#allocation2] sm:$0xff]
      %163 = vst [vmem:[#allocation8] sm:$0xff] %v162
    $region25: #{tpu_custom_call.1} parent=1 // pred_fallthru
      _
    // Predicated region
    $region26: #{tpu_custom_call.1} parent=1 // pred_check
      _
    $region27: #{tpu_custom_call.1} parent=1 // pred_check_branch
      %165 = sbr.rel (0) target = $region29
    $region28: #{tpu_custom_call.1} parent=1 // pred_region
      %167 = vsyncadd [#allocation5], 0
      %s169 = sshll.u32 [#allocation8], 4
      %s170 = int_to_ptr.vmem [resolvable:$true] %s169
      %s171 = sshll.u32 %s2, 4
      %s172 = int_to_ptr.hbm [resolvable:$true] %s171
      %174 = dma.vmem_to_hbm [thread:$0]  %s170, 128, %s172, [#allocation5]
    $region29: #{tpu_custom_call.1} parent=1 // pred_fallthru
      _
    // Predicated region
    $region30: #{tpu_custom_call.1} parent=1 // pred_check
      _
    $region31: #{tpu_custom_call.1} parent=1 // pred_check_branch
      %176 = sbr.rel (0) target = $region33
    $region32: #{tpu_custom_call.1} parent=1 // pred_region
      %178 = dma.done [#allocation5], 128
    $region33: #{tpu_custom_call.1} parent=1 // pred_fallthru
      _
    %179 = vsyncpa [#allocation4], 1
    %180 = vsyncpa [#allocation7], 1
    %181 = vsyncpa [#allocation5], 1

</llo_original>
